<compile_context>
chip_gen: v6e
topology: v6e:2x2x1
jax: 0.10.0
libtpu: 0.0.40
codegen_flags: <defaults>
</compile_context>

<pallas_src>
import math

import jax
import jax.numpy as jnp
from jax import lax
from jax.experimental import pallas as pl
from jax.experimental.pallas import tpu as pltpu

IN_DIM = 1                  # x dimensionality (module only self-consistent for 1)
OUT_DIM = 8                 # resizer output channels
IN_CHAN = IN_DIM + 1        # density channel(s) + y channel

_CHUNK = 8                  # sublane height of accumulators / per-iter context slab


def _round_up(x, m):
    return ((x + m - 1) // m) * m


def _default_compute_dtype():
    """bf16 elementwise/exp chain on v6e/v7x; f32 on v5e and older (no bf16 VPU/EUP)."""
    try:
        kind = jax.devices()[0].device_kind.lower()
    except Exception:
        return jnp.float32
    for tag in ("v2", "v3", "v4", "v5"):
        if tag in kind:
            return jnp.float32
    return jnp.bfloat16


def _is_tied(log_sigma):
    """True if all lengthscales are equal (concrete params only)."""
    try:
        return bool(jnp.all(log_sigma == log_sigma[0]))
    except Exception:   # traced params -> take the general (always-correct) path
        return False


# ---------------------------------------------------------------------------
# Pallas kernel factory.
#   grid = (Nt_tiles, Nc_tiles); axis 1 (context) is the reduction axis.
# ---------------------------------------------------------------------------
def _make_setconv_kernel(block_nc, tied):
    assert block_nc % _CHUNK == 0
    n_chunks = block_nc // _CHUNK
    loop_unroll = True if n_chunks <= 64 else 8

    def kernel(xc0_ref, xc1_ref, yc_ref, xt0_ref, xt1_ref,
               wd_ref, wc_ref, b_ref, out_ref, dens_acc, conv_acc):
        k = pl.program_id(1)

        @pl.when(k == 0)
        def _init():
            dens_acc[...] = jnp.zeros_like(dens_acc)
            conv_acc[...] = jnp.zeros_like(conv_acc)

        # Hoisted out of the chunk loop: target rows (already scale-folded).
        xt0 = xt0_ref[...]                               # [1, tile_nt]
        xt1 = xt0 if tied else xt1_ref[...]              # [1, tile_nt]

        def body(c, carry):
            i = pl.multiple_of(c * _CHUNK, _CHUNK)
            xc0 = xc0_ref[pl.ds(i, _CHUNK), :]           # [8, 1]
            yc = yc_ref[pl.ds(i, _CHUNK), :]             # [8, 1]
            # RBF weights; scale pre-folded -> pure sub/abs/neg/exp (EUP-bound).
            e0 = jnp.exp(-jnp.abs(xc0 - xt0))            # [8, tile_nt] in vregs
            if tied:
                e1 = e0                                  # tied sigmas: reuse exp map
            else:
                xc1 = xc1_ref[pl.ds(i, _CHUNK), :]
                e1 = jnp.exp(-jnp.abs(xc1 - xt1))
            # f32 accumulation over full-sublane slabs (plain vadds, no XLU).
            dens_acc[...] += e0.astype(jnp.float32)
            conv_acc[...] += (yc * e1).astype(jnp.float32)
            return carry

        lax.fori_loop(0, n_chunks, body, 0, unroll=loop_unroll)

        @pl.when(k == pl.num_programs(1) - 1)
        def _finalize():
            # Single cross-sublane collapse of the [8, tile_nt] partials.
            density = jnp.sum(dens_acc[...], axis=0, keepdims=True)   # [1, tile_nt]
            conv = jnp.sum(conv_acc[...], axis=0, keepdims=True)      # [1, tile_nt]
            norm_conv = conv / (density + 1e-8)
            # resizer nn.Linear(2, OUT_DIM) as broadcast VPU FMAs:
            #   out[j, :] = W[j,0]*density + W[j,1]*norm_conv + b[j]
            # -> lane-dense [OUT_DIM, tile_nt] store.
            out_ref[...] = (wd_ref[...] * density
                            + wc_ref[...] * norm_conv
                            + b_ref[...]).astype(out_ref.dtype)

    return kernel


# ---------------------------------------------------------------------------
# Wrapper: padding / layout / scale-folding plumbing + pallas_call.
# ---------------------------------------------------------------------------
def setconv_forward(x_c, y_c, x_t, params, *, tile_nt=512, tile_nc=256,
                    compute_dtype=None):
    if compute_dtype is None:
        compute_dtype = _default_compute_dtype()
    if x_t.ndim == 1:
        x_t = x_t[:, None]
    nc, nt = x_c.shape[0], x_t.shape[0]

    # --- tiling ------------------------------------------------------------
    nt128 = _round_up(nt, 128)
    # Keep >= 2 Nt tiles where possible so the "parallel" axis can shard across
    # both v7x TensorCores (negligible cost on single-TC chips).
    tile_nt = min(tile_nt, max(128, (nt128 // 256) * 128))
    nt_pad = _round_up(nt, tile_nt)
    tile_nc = max(_CHUNK, _round_up(min(tile_nc, _round_up(nc, _CHUNK)), _CHUNK))
    nc_pad = _round_up(nc, tile_nc)

    # --- parameters: fold the RBF scale into the inputs ---------------------
    sigma2 = jnp.exp(params["log_sigma"].astype(jnp.float32)) ** 2    # [IN_CHAN]
    inv = 0.5 / sigma2          # exp(-0.5*d/sigma^2) == exp(-|inv*xc - inv*xt|)
    tied = _is_tied(params["log_sigma"])

    weight = params["weight"].astype(jnp.float32)                     # [OUT_DIM, IN_CHAN]
    w_dens = weight[:, :IN_DIM]                                       # [OUT_DIM, 1]
    w_conv = weight[:, IN_DIM:]                                       # [OUT_DIM, 1]
    bias = params["bias"].astype(jnp.float32)[:, None]                # [OUT_DIM, 1]

    xc_f = x_c[:, 0].astype(jnp.float32)
    xt_f = x_t[:, 0].astype(jnp.float32)

    def col(vals, fill):
        buf = jnp.full((nc_pad, 1), fill, compute_dtype)
        return buf.at[:nc, 0].set(vals.astype(compute_dtype))

    def row(vals):
        buf = jnp.zeros((1, nt_pad), compute_dtype)
        return buf.at[0, :nt].set(vals.astype(compute_dtype))

    # +inf sentinel on padded context rows: exp(-|inf - xt|) == 0 exactly for
    # any finite lengthscale, so padded rows never leak into density/conv.
    xc0_col = col(xc_f * inv[0], jnp.inf)          # density-channel scaled x_c
    xt0_row = row(xt_f * inv[0])                   # density-channel scaled x_t
    if tied:
        xc1_col, xt1_row = xc0_col, xt0_row        # unused by the tied kernel
    else:
        xc1_col = col(xc_f * inv[1], jnp.inf)      # conv-channel scaled x_c
        xt1_row = row(xt_f * inv[1])               # conv-channel scaled x_t
    yc_col = jnp.zeros((nc_pad, 1), compute_dtype).at[:nc, :].set(
        y_c.astype(compute_dtype))

    grid = (nt_pad // tile_nt, nc_pad // tile_nc)
    vmem = pl.BlockSpec(memory_space=pltpu.MemorySpace.VMEM)

    kernel = _make_setconv_kernel(tile_nc, tied)

    out = pl.pallas_call(
        kernel,
        out_shape=jax.ShapeDtypeStruct((OUT_DIM, nt_pad), jnp.float32),
        grid_spec=pltpu.PrefetchScalarGridSpec(
            num_scalar_prefetch=0,
            grid=grid,
            in_specs=[
                pl.BlockSpec((tile_nc, 1), lambda i, k: (k, 0)),    # x_c (ch 0)
                pl.BlockSpec((tile_nc, 1), lambda i, k: (k, 0)),    # x_c (ch 1)
                pl.BlockSpec((tile_nc, 1), lambda i, k: (k, 0)),    # y_c
                pl.BlockSpec((1, tile_nt), lambda i, k: (0, i)),    # x_t (ch 0)
                pl.BlockSpec((1, tile_nt), lambda i, k: (0, i)),    # x_t (ch 1)
                vmem, vmem, vmem,                                   # W_d, W_c, b
            ],
            out_specs=pl.BlockSpec((OUT_DIM, tile_nt), lambda i, k: (0, i)),
            scratch_shapes=[pltpu.VMEM((_CHUNK, tile_nt), jnp.float32),   # density acc
                            pltpu.VMEM((_CHUNK, tile_nt), jnp.float32)],  # conv acc
        ),
        compiler_params=pltpu.CompilerParams(
            dimension_semantics=("parallel", "arbitrary")),
        cost_estimate=pl.CostEstimate(
            flops=5 * nc_pad * nt_pad,
            transcendentals=(1 if tied else 2) * nc_pad * nt_pad,
            bytes_accessed=4 * (3 * nc_pad + 2 * nt_pad + OUT_DIM * nt_pad)),
    )(xc0_col, xc1_col, yc_col, xt0_row, xt1_row, w_dens, w_conv, bias)

    return out[:, :nt].T                                       # [Nt, OUT_DIM]


# ---------------------------------------------------------------------------
# Pure-JAX reference (mirrors the PyTorch forward literally).
# ---------------------------------------------------------------------------
def setconv_ref(x_c, y_c, x_t, params):
    if x_t.ndim == 1:
        x_t = x_t[:, None]
    sigma = jnp.exp(params["log_sigma"])
    dists = jnp.sqrt(
        jnp.maximum(jnp.sum((x_c[:, None, :] - x_t[None, :, :]) ** 2, -1), 0.0)
    )                                                                  # [Nc, Nt]
    w = jnp.exp(-0.5 * dists[..., None] / sigma ** 2)                  # [Nc, Nt, in_chan]
    F0 = jnp.concatenate([jnp.ones_like(x_c), y_c], axis=-1)           # [Nc, in_chan]
    F = (F0[:, None, :] * w).sum(0)                                    # [Nt, in_chan]
    density, conv = F[:, :IN_DIM], F[:, IN_DIM:]
    norm_conv = conv / (density + 1e-8)
    F = jnp.concatenate([density, norm_conv], axis=-1)
    return F @ params["weight"].T + params["bias"]


def init_params(key):
    k_w, k_b = jax.random.split(key)
    bound = 1.0 / math.sqrt(IN_CHAN)          # PyTorch nn.Linear default init range
    return {
        "log_sigma": jnp.log(0.5) * jnp.ones((IN_CHAN,), jnp.float32),
        "weight": jax.random.uniform(k_w, (OUT_DIM, IN_CHAN), jnp.float32,
                                     minval=-bound, maxval=bound),
        "bias": jax.random.uniform(k_b, (OUT_DIM,), jnp.float32,
                                   minval=-bound, maxval=bound),
    }


if __name__ == "__main__":
    key = jax.random.PRNGKey(0)
    k_p, k_xc, k_yc, k_xt = jax.random.split(key, 4)

    params = init_params(k_p)          # tied lengthscales (default init)

    # Case 1: small, single grid step, tied-sigma fast path; 1-D x_t exercises
    # the unsqueeze path. f32 compute -> tight tolerance.
    n_ctx, n_tgt = 8, 16
    x_c = jax.random.normal(k_xc, (n_ctx, IN_DIM), jnp.float32)
    y_c = jax.random.normal(k_yc, (n_ctx, 1), jnp.float32)
    x_t = jnp.linspace(-2.0, 2.0, n_tgt, dtype=jnp.float32)

    out = jax.block_until_ready(
        setconv_forward(x_c, y_c, x_t, params, compute_dtype=jnp.float32))
    ref = jax.block_until_ready(setconv_ref(x_c, y_c, x_t, params))
    assert out.shape == (n_tgt, OUT_DIM), out.shape
    assert jnp.allclose(out, ref, rtol=1e-5, atol=1e-5), (
        "mismatch case1", float(jnp.max(jnp.abs(out - ref))))

    # Case 2: untied lengthscales (general two-exp kernel), multi-tile grid on
    # both axes, context sentinel padding + discarded target columns, chunked
    # inner loop with multiple chunks. f32 compute -> tight tolerance.
    params2 = dict(params)
    params2["log_sigma"] = jnp.log(jnp.array([0.5, 0.3], jnp.float32))
    n_ctx2, n_tgt2 = 20, 200
    x_c2 = jax.random.normal(k_xc, (n_ctx2, IN_DIM), jnp.float32)
    y_c2 = jax.random.normal(k_yc, (n_ctx2, 1), jnp.float32)
    x_t2 = jnp.linspace(-3.0, 3.0, n_tgt2, dtype=jnp.float32)[:, None]

    out2 = jax.block_until_ready(
        setconv_forward(x_c2, y_c2, x_t2, params2, tile_nt=128, tile_nc=16,
                        compute_dtype=jnp.float32))
    ref2 = jax.block_until_ready(setconv_ref(x_c2, y_c2, x_t2, params2))
    assert out2.shape == (n_tgt2, OUT_DIM), out2.shape
    assert jnp.allclose(out2, ref2, rtol=1e-5, atol=1e-5), (
        "mismatch case2", float(jnp.max(jnp.abs(out2 - ref2))))

    # Case 3: auto compute dtype (bf16 elementwise chain on v6e/v7x, f32 on
    # v5e) with default tiling; accumulation/finalize stay f32 -> loose check.
    out3 = jax.block_until_ready(setconv_forward(x_c2, y_c2, x_t2, params))
    ref3 = jax.block_until_ready(setconv_ref(x_c2, y_c2, x_t2, params))
    assert out3.shape == (n_tgt2, OUT_DIM), out3.shape
    assert jnp.allclose(out3, ref3, rtol=1e-1, atol=5e-1), (
        "mismatch case3", float(jnp.max(jnp.abs(out3 - ref3))))

    print("KERNEL_OK")
</pallas_src>

<mosaic_0001>
module attributes {stable_mosaic.version = 11 : i64} {
  func.func @kernel(%arg0: i32, %arg1: i32, %arg2: memref<8x1xf32, #tpu.memory_space<vmem>>, %arg3: memref<8x1xf32, #tpu.memory_space<vmem>>, %arg4: memref<8x1xf32, #tpu.memory_space<vmem>>, %arg5: memref<1x128xf32, #tpu.memory_space<vmem>>, %arg6: memref<1x128xf32, #tpu.memory_space<vmem>>, %arg7: memref<8x1xf32, #tpu.memory_space<vmem>>, %arg8: memref<8x1xf32, #tpu.memory_space<vmem>>, %arg9: memref<8x1xf32, #tpu.memory_space<vmem>>, %arg10: memref<8x128xf32, #tpu.memory_space<vmem>>, %arg11: memref<8x128xf32, #tpu.memory_space<vmem>>, %arg12: memref<8x128xf32, #tpu.memory_space<vmem>>) attributes {dimension_semantics = [#tpu.dimension_semantics<parallel>, #tpu.dimension_semantics<arbitrary>], iteration_bounds = array<i64: 1, 1>, scalar_prefetch = 0 : i64, scratch_operands = 2 : i64, tpu.core_type = #tpu.core_type<tc>, window_params = [{transform_indices = @transform_0, window_bounds = array<i64: 8, 1>}, {transform_indices = @transform_1, window_bounds = array<i64: 8, 1>}, {transform_indices = @transform_2, window_bounds = array<i64: 8, 1>}, {transform_indices = @transform_3, window_bounds = array<i64: 1, 128>}, {transform_indices = @transform_4, window_bounds = array<i64: 1, 128>}, {pipeline_mode = #tpu.pipeline_mode<synchronous>, transform_indices = @transform_5, window_bounds = array<i64: 8, 1>}, {pipeline_mode = #tpu.pipeline_mode<synchronous>, transform_indices = @transform_6, window_bounds = array<i64: 8, 1>}, {pipeline_mode = #tpu.pipeline_mode<synchronous>, transform_indices = @transform_7, window_bounds = array<i64: 8, 1>}, {transform_indices = @transform_8, window_bounds = array<i64: 8, 128>}]} {
    %c0_i32 = arith.constant 0 : i32
    %0 = arith.cmpi eq, %arg1, %c0_i32 : i32
    %1 = arith.extui %0 : i1 to i32
    %c0_i32_0 = arith.constant 0 : i32
    %2 = arith.cmpi ne, %1, %c0_i32_0 : i32
    scf.if %2 {
      %cst_15 = arith.constant 0.000000e+00 : f32
      %28 = vector.broadcast %cst_15 : f32 to vector<8x128xf32>
      %c0_16 = arith.constant 0 : index
      %c0_17 = arith.constant 0 : index
      %29 = vector.load %arg11[%c0_16, %c0_17] : memref<8x128xf32, #tpu.memory_space<vmem>>, vector<8x128xf32>
      tpu.vector_store %arg11[%c0_16, %c0_17], %28 {strides = array<i32>} : memref<8x128xf32, #tpu.memory_space<vmem>>, vector<8x128xf32>,
      %cst_18 = arith.constant 0.000000e+00 : f32
      %30 = vector.broadcast %cst_18 : f32 to vector<8x128xf32>
      %c0_19 = arith.constant 0 : index
      %c0_20 = arith.constant 0 : index
      %31 = vector.load %arg12[%c0_19, %c0_20] : memref<8x128xf32, #tpu.memory_space<vmem>>, vector<8x128xf32>
      tpu.vector_store %arg12[%c0_19, %c0_20], %30 {strides = array<i32>} : memref<8x128xf32, #tpu.memory_space<vmem>>, vector<8x128xf32>,
    } else {
    }
    %c0 = arith.constant 0 : index
    %c0_1 = arith.constant 0 : index
    %3 = vector.load %arg5[%c0, %c0_1] : memref<1x128xf32, #tpu.memory_space<vmem>>, vector<1x128xf32>
    %c0_i32_2 = arith.constant 0 : i32
    %c8_i32 = arith.constant 8 : i32
    %4 = arith.muli %c0_i32_2, %c8_i32 : i32
    %5 = tpu.assume_multiple %4, 8 : i32
    %6 = arith.index_cast %5 : i32 to index
    %c0_3 = arith.constant 0 : index
    %7 = vector.load %arg2[%6, %c0_3] : memref<8x1xf32, #tpu.memory_space<vmem>>, vector<8x1xf32>
    %8 = arith.index_cast %5 : i32 to index
    %c0_4 = arith.constant 0 : index
    %9 = vector.load %arg4[%8, %c0_4] : memref<8x1xf32, #tpu.memory_space<vmem>>, vector<8x1xf32>
    %10 = vector.broadcast %7 : vector<8x1xf32> to vector<8x128xf32>
    %11 = vector.broadcast %3 : vector<1x128xf32> to vector<8x128xf32>
    %12 = arith.subf %10, %11 : vector<8x128xf32>
    %13 = math.absf %12 : vector<8x128xf32>
    %cst = arith.constant 0.000000e+00 : f32
    %14 = vector.broadcast %cst : f32 to vector<8x128xf32>
    %15 = arith.subf %14, %13 : vector<8x128xf32>
    %16 = math.exp %15 : vector<8x128xf32>
    %c0_5 = arith.constant 0 : index
    %c0_6 = arith.constant 0 : index
    %17 = vector.load %arg11[%c0_5, %c0_6] : memref<8x128xf32, #tpu.memory_space<vmem>>, vector<8x128xf32>
    %18 = arith.addf %17, %16 : vector<8x128xf32>
    %c0_7 = arith.constant 0 : index
    %c0_8 = arith.constant 0 : index
    %19 = vector.load %arg11[%c0_7, %c0_8] : memref<8x128xf32, #tpu.memory_space<vmem>>, vector<8x128xf32>
    tpu.vector_store %arg11[%c0_7, %c0_8], %18 {strides = array<i32>} : memref<8x128xf32, #tpu.memory_space<vmem>>, vector<8x128xf32>,
    %c0_9 = arith.constant 0 : index
    %c0_10 = arith.constant 0 : index
    %20 = vector.load %arg12[%c0_9, %c0_10] : memref<8x128xf32, #tpu.memory_space<vmem>>, vector<8x128xf32>
    %21 = vector.broadcast %9 : vector<8x1xf32> to vector<8x128xf32>
    %22 = arith.mulf %21, %16 : vector<8x128xf32>
    %23 = arith.addf %20, %22 : vector<8x128xf32>
    %c0_11 = arith.constant 0 : index
    %c0_12 = arith.constant 0 : index
    %24 = vector.load %arg12[%c0_11, %c0_12] : memref<8x128xf32, #tpu.memory_space<vmem>>, vector<8x128xf32>
    tpu.vector_store %arg12[%c0_11, %c0_12], %23 {strides = array<i32>} : memref<8x128xf32, #tpu.memory_space<vmem>>, vector<8x128xf32>,
    %c1_i32 = arith.constant 1 : i32
    %c0_i32_13 = arith.constant 0 : i32
    %25 = arith.cmpi eq, %arg1, %c0_i32_13 : i32
    %26 = arith.extui %25 : i1 to i32
    %c0_i32_14 = arith.constant 0 : i32
    %27 = arith.cmpi ne, %26, %c0_i32_14 : i32
    scf.if %27 {
      %c0_15 = arith.constant 0 : index
      %c0_16 = arith.constant 0 : index
      %28 = vector.load %arg11[%c0_15, %c0_16] : memref<8x128xf32, #tpu.memory_space<vmem>>, vector<8x128xf32>
      %cst_17 = arith.constant dense<0.000000e+00> : vector<128xf32>
      %29 = vector.multi_reduction <add>, %28, %cst_17 [0] : vector<8x128xf32> to vector<128xf32>
      %30 = vector.shape_cast %29 : vector<128xf32> to vector<1x128xf32>
      %c0_18 = arith.constant 0 : index
      %c0_19 = arith.constant 0 : index
      %31 = vector.load %arg12[%c0_18, %c0_19] : memref<8x128xf32, #tpu.memory_space<vmem>>, vector<8x128xf32>
      %cst_20 = arith.constant dense<0.000000e+00> : vector<128xf32>
      %32 = vector.multi_reduction <add>, %31, %cst_20 [0] : vector<8x128xf32> to vector<128xf32>
      %33 = vector.shape_cast %32 : vector<128xf32> to vector<1x128xf32>
      %cst_21 = arith.constant 9.99999993E-9 : f32
      %34 = vector.broadcast %cst_21 : f32 to vector<1x128xf32>
      %35 = arith.addf %30, %34 : vector<1x128xf32>
      %36 = arith.divf %33, %35 : vector<1x128xf32>
      %c0_22 = arith.constant 0 : index
      %c0_23 = arith.constant 0 : index
      %37 = vector.load %arg7[%c0_22, %c0_23] : memref<8x1xf32, #tpu.memory_space<vmem>>, vector<8x1xf32>
      %38 = vector.broadcast %37 : vector<8x1xf32> to vector<8x128xf32>
      %39 = vector.broadcast %30 : vector<1x128xf32> to vector<8x128xf32>
      %40 = arith.mulf %38, %39 : vector<8x128xf32>
      %c0_24 = arith.constant 0 : index
      %c0_25 = arith.constant 0 : index
      %41 = vector.load %arg8[%c0_24, %c0_25] : memref<8x1xf32, #tpu.memory_space<vmem>>, vector<8x1xf32>
      %42 = vector.broadcast %41 : vector<8x1xf32> to vector<8x128xf32>
      %43 = vector.broadcast %36 : vector<1x128xf32> to vector<8x128xf32>
      %44 = arith.mulf %42, %43 : vector<8x128xf32>
      %45 = arith.addf %40, %44 : vector<8x128xf32>
      %c0_26 = arith.constant 0 : index
      %c0_27 = arith.constant 0 : index
      %46 = vector.load %arg9[%c0_26, %c0_27] : memref<8x1xf32, #tpu.memory_space<vmem>>, vector<8x1xf32>
      %47 = vector.broadcast %46 : vector<8x1xf32> to vector<8x128xf32>
      %48 = arith.addf %45, %47 : vector<8x128xf32>
      %c0_28 = arith.constant 0 : index
      %c0_29 = arith.constant 0 : index
      %49 = vector.load %arg10[%c0_28, %c0_29] : memref<8x128xf32, #tpu.memory_space<vmem>>, vector<8x128xf32>
      tpu.vector_store %arg10[%c0_28, %c0_29], %48 {strides = array<i32>} : memref<8x128xf32, #tpu.memory_space<vmem>>, vector<8x128xf32>,
    } else {
    }
    return
  }
  func.func @transform_0(%arg0: i32, %arg1: i32) -> (i32, i32) {
    %c0_i32 = arith.constant 0 : i32
    %c0_i32_0 = arith.constant 0 : i32
    return %arg1, %c0_i32 : i32, i32
  }
  func.func @transform_1(%arg0: i32, %arg1: i32) -> (i32, i32) {
    %c0_i32 = arith.constant 0 : i32
    %c0_i32_0 = arith.constant 0 : i32
    return %arg1, %c0_i32 : i32, i32
  }
  func.func @transform_2(%arg0: i32, %arg1: i32) -> (i32, i32) {
    %c0_i32 = arith.constant 0 : i32
    %c0_i32_0 = arith.constant 0 : i32
    return %arg1, %c0_i32 : i32, i32
  }
  func.func @transform_3(%arg0: i32, %arg1: i32) -> (i32, i32) {
    %c0_i32 = arith.constant 0 : i32
    %c0_i32_0 = arith.constant 0 : i32
    return %c0_i32, %arg0 : i32, i32
  }
  func.func @transform_4(%arg0: i32, %arg1: i32) -> (i32, i32) {
    %c0_i32 = arith.constant 0 : i32
    %c0_i32_0 = arith.constant 0 : i32
    return %c0_i32, %arg0 : i32, i32
  }
  func.func @transform_5(%arg0: i32, %arg1: i32) -> (i32, i32) {
    %c0_i32 = arith.constant 0 : i32
    %c0_i32_0 = arith.constant 0 : i32
    %c0_i32_1 = arith.constant 0 : i32
    return %c0_i32, %c0_i32_0 : i32, i32
  }
  func.func @transform_6(%arg0: i32, %arg1: i32) -> (i32, i32) {
    %c0_i32 = arith.constant 0 : i32
    %c0_i32_0 = arith.constant 0 : i32
    %c0_i32_1 = arith.constant 0 : i32
    return %c0_i32, %c0_i32_0 : i32, i32
  }
  func.func @transform_7(%arg0: i32, %arg1: i32) -> (i32, i32) {
    %c0_i32 = arith.constant 0 : i32
    %c0_i32_0 = arith.constant 0 : i32
    %c0_i32_1 = arith.constant 0 : i32
    return %c0_i32, %c0_i32_0 : i32, i32
  }
  func.func @transform_8(%arg0: i32, %arg1: i32) -> (i32, i32) {
    %c0_i32 = arith.constant 0 : i32
    %c0_i32_0 = arith.constant 0 : i32
    return %c0_i32, %arg0 : i32, i32
  }
}

</mosaic_0001>

<llo_original>
// kernel: tpu_custom_call.1
$region0: #{tpu_custom_call.1}
  #allocation0 [shape = 'u32[]', space=smem, size = 0x4, offset = 0x4, fixed_abs, tag = 'smem constant byte address 0x4 - core index']
  #allocation1 [shape = 'u32[144,128]{1,0:T(1,128)}', space=vmem, size = 0x12000, scoped, tag = 'internal scratch']
  #allocation2 [shape = 'f32[8,128]{1,0:T(8,128)}', space=vmem, size = 0x1000, scoped, tag = 'scratch operand']
  #allocation3 [shape = 'f32[8,128]{1,0:T(8,128)}', space=vmem, size = 0x1000, scoped, tag = 'scratch operand']
  %s0 = inlined_call_operand.vmem [shape: f32[8,1], index: 0, kind: input, shape index: {}]
  %s1 = inlined_call_operand.vmem [shape: f32[8,1], index: 1, kind: input, shape index: {}]
  %s2 = inlined_call_operand.vmem [shape: f32[8,1], index: 2, kind: input, shape index: {}]
  %s3 = inlined_call_operand.vmem [shape: f32[1,128], index: 3, kind: input, shape index: {}]
  %s4 = inlined_call_operand.vmem [shape: f32[1,128], index: 4, kind: input, shape index: {}]
  %s5 = inlined_call_operand.vmem [shape: f32[8,1], index: 5, kind: input, shape index: {}]
  %s6 = inlined_call_operand.vmem [shape: f32[8,1], index: 6, kind: input, shape index: {}]
  %s7 = inlined_call_operand.vmem [shape: f32[8,1], index: 7, kind: input, shape index: {}]
  %s8 = inlined_call_operand.hbm [shape: f32[8,128], index: 8, kind: output, shape index: {}]
  %s9 = sld [smem:[#allocation0]]
  $region50: #{tpu_custom_call.1} parent=0
    _
  %s11 = ssub.s32 1, %s9
  %s12 = scalar_select 0, %s11, %s9
  $region1: #{tpu_custom_call.1} parent=0
    #allocation4 [shape = 'u8[4096]{0}', space=vmem, size = 0x1000, scoped, tag = 'output window, operand 0, single buffered']
    #allocation5 [shape = 's32[1]{0}', space=sflag, size = 0x4, scoped, tag = 'scoped memory for tpu_custom_call.1']
    %13 = vsyncpa [#allocation5], 0
    // Predicated region
    $region2: #{tpu_custom_call.1} parent=1 // pred_check
      _
    $region3: #{tpu_custom_call.1} parent=1 // pred_check_branch
      %15 = sbr.rel (0) target = $region5
    $region4: #{tpu_custom_call.1} parent=1 // pred_region
      _
    $region5: #{tpu_custom_call.1} parent=1 // pred_fallthru
      _
    // Predicated region
    $region6: #{tpu_custom_call.1} parent=1 // pred_check
      _
    $region7: #{tpu_custom_call.1} parent=1 // pred_check_branch
      %17 = sbr.rel (0) target = $region9
    $region8: #{tpu_custom_call.1} parent=1 // pred_region
      _
    $region9: #{tpu_custom_call.1} parent=1 // pred_fallthru
      _
    // Predicated region
    $region10: #{tpu_custom_call.1} parent=1 // pred_check
      _
    $region11: #{tpu_custom_call.1} parent=1 // pred_check_branch
      %19 = sbr.rel (0) target = $region13
    $region12: #{tpu_custom_call.1} parent=1 // pred_region
      _
    $region13: #{tpu_custom_call.1} parent=1 // pred_fallthru
      _
    // Predicated region
    $region14: #{tpu_custom_call.1} parent=1 // pred_check
      _
    $region15: #{tpu_custom_call.1} parent=1 // pred_check_branch
      %21 = sbr.rel (0) target = $region17
    $region16: #{tpu_custom_call.1} parent=1 // pred_region
      _
    $region17: #{tpu_custom_call.1} parent=1 // pred_fallthru
      _
    // Predicated region
    $region18: #{tpu_custom_call.1} parent=1 // pred_check
      _
    $region19: #{tpu_custom_call.1} parent=1 // pred_check_branch
      %23 = sbr.rel (0) target = $region21
    $region20: #{tpu_custom_call.1} parent=1 // pred_region
      _
    $region21: #{tpu_custom_call.1} parent=1 // pred_fallthru
      _
    // Predicated region
    $region22: #{tpu_custom_call.1} parent=1 // pred_check
      _
    $region23: #{tpu_custom_call.1} parent=1 // pred_check_branch
      %25 = sbr.rel (0) target = $region25
    $region24: #{tpu_custom_call.1} parent=1 // pred_region
      _
    $region25: #{tpu_custom_call.1} parent=1 // pred_fallthru
      _
    // Predicated region
    $region26: #{tpu_custom_call.1} parent=1 // pred_check
      _
    $region27: #{tpu_custom_call.1} parent=1 // pred_check_branch
      %27 = sbr.rel (0) target = $region29
    $region28: #{tpu_custom_call.1} parent=1 // pred_region
      _
    $region29: #{tpu_custom_call.1} parent=1 // pred_fallthru
      _
    // Predicated region
    $region30: #{tpu_custom_call.1} parent=1 // pred_check
      _
    $region31: #{tpu_custom_call.1} parent=1 // pred_check_branch
      %29 = sbr.rel (0) target = $region33
    $region32: #{tpu_custom_call.1} parent=1 // pred_region
      _
    $region33: #{tpu_custom_call.1} parent=1 // pred_fallthru
      _
    %p30 = scmp.eq.s32.totalorder 0, 0
    // Predicated region
    $region34: #{tpu_custom_call.1} parent=1 // pred_check
      %p31 = pneg %p30
    $region35: #{tpu_custom_call.1} parent=1 // pred_check_branch
      %33 = sbr.rel (%p31) target = $region37
    $region36: #{tpu_custom_call.1} parent=1 // pred_region
      %34 = vst [vmem:[#allocation2] sm:$0xff] 0.0
      %35 = vst [vmem:[#allocation3] sm:$0xff] 0.0
    $region37: #{tpu_custom_call.1} parent=1 // pred_fallthru
      _
    %v36 = vld [vmem:[%s3] sm:$0x1]
    %v37 = vld [vmem:[%s0] sm:$0xff]
    %v38 = vld [vmem:[%s2] sm:$0xff]
    %40 = vset.pattern.permute.xlu0 0
    %41 = vperm.xlu0 %40, %v37
    %v42 = vpop.permute.xlu0 %41
    %v45 = vlaneseq
    %v46 = vshrl.u32 %v45, 7
    %v47 = vsub.s32 0, %v46
    %v48 = vrot.slane %v36, %v47
    %v50 = vsub.f32 %v42, %v48
    %v51 = vand.u32 2147483647, %v50
    %v52 = vsub.f32 0.0, %v51
    %v53 = vmul.f32 %v52, 1.442695
    %v54 = vpow.pop %v53
    %v55 = vld [vmem:[#allocation2] sm:$0xff]
    %v56 = vadd.f32 %v55, %v54
    %57 = vst [vmem:[#allocation2] sm:$0xff] %v56
    %v58 = vld [vmem:[#allocation3] sm:$0xff]
    %60 = vset.pattern.permute.xlu0 0
    %61 = vperm.xlu0 %60, %v38
    %v62 = vpop.permute.xlu0 %61
    %v64 = vmul.f32 %v62, %v54
    %v65 = vadd.f32 %v58, %v64
    %66 = vst [vmem:[#allocation3] sm:$0xff] %v65
    // Predicated region
    $region38: #{tpu_custom_call.1} parent=1 // pred_check
      %p67 = pneg %p30
    $region39: #{tpu_custom_call.1} parent=1 // pred_check_branch
      %69 = sbr.rel (%p67) target = $region41
    $region40: #{tpu_custom_call.1} parent=1 // pred_region
      %v70 = vld [vmem:[#allocation2] sm:$0xff]
      %v71 = vrot.slane %v70, 4
      %v72 = vadd.f32 %v70, %v71
      %v73 = vrot.slane %v72, 2
      %v74 = vadd.f32 %v72, %v73
      %v75 = vrot.slane %v74, 1
      %v76 = vadd.f32 %v74, %v75
      %v77 = vld [vmem:[#allocation3] sm:$0xff]
      %v78 = vrot.slane %v77, 4
      %v79 = vadd.f32 %v77, %v78
      %v80 = vrot.slane %v79, 2
      %v81 = vadd.f32 %v79, %v80
      %v82 = vrot.slane %v81, 1
      %v83 = vadd.f32 %v81, %v82
      %v84 = vadd.f32 %v76, 1e-08
      %v85 = vrcp.pop %v84
      %v86 = vmul.f32 %v83, %v85
      %v87 = vld [vmem:[%s5] sm:$0xff]
      %89 = vset.pattern.permute.xlu0 0
      %90 = vperm.xlu0 %89, %v87
      %v91 = vpop.permute.xlu0 %90
      %v93 = vmul.f32 %v91, %v76
      %v94 = vld [vmem:[%s6] sm:$0xff]
      %96 = vset.pattern.permute.xlu0 0
      %97 = vperm.xlu0 %96, %v94
      %v98 = vpop.permute.xlu0 %97
      %v100 = vmul.f32 %v98, %v86
      %v101 = vadd.f32 %v93, %v100
      %v102 = vld [vmem:[%s7] sm:$0xff]
      %104 = vset.pattern.permute.xlu0 0
      %105 = vperm.xlu0 %104, %v102
      %v106 = vpop.permute.xlu0 %105
      %v108 = vadd.f32 %v101, %v106
      %109 = vst [vmem:[#allocation4] sm:$0xff] %v108
    $region41: #{tpu_custom_call.1} parent=1 // pred_fallthru
      _
    // Predicated region
    $region42: #{tpu_custom_call.1} parent=1 // pred_check
      _
    $region43: #{tpu_custom_call.1} parent=1 // pred_check_branch
      %111 = sbr.rel (0) target = $region45
    $region44: #{tpu_custom_call.1} parent=1 // pred_region
      %s113 = ssub.s32 128, 128
      %114 = vsyncadd [#allocation5], %s113
      %s116 = sshll.u32 [#allocation4], 4
      %s117 = int_to_ptr.vmem [resolvable:$true] %s116
      %119 = dma.vmem_to_hbm [thread:$0]  %s117, 128, %s8, [#allocation5]
    $region45: #{tpu_custom_call.1} parent=1 // pred_fallthru
      _
    // Predicated region
    $region46: #{tpu_custom_call.1} parent=1 // pred_check
      _
    $region47: #{tpu_custom_call.1} parent=1 // pred_check_branch
      %121 = sbr.rel (0) target = $region49
    $region48: #{tpu_custom_call.1} parent=1 // pred_region
      %122 = dma.done [#allocation5], 128
    $region49: #{tpu_custom_call.1} parent=1 // pred_fallthru
      _
    %123 = vsyncpa [#allocation5], 1

</llo_original>
